<compile_context>
chip_gen: v6e
topology: v6e:2x2x1
jax: 0.10.0
libtpu: 0.0.40
codegen_flags: <defaults>
</compile_context>

<pallas_src>
import functools

import jax
import jax.numpy as jnp
from jax import lax
from jax.experimental import pallas as pl
from jax.experimental.pallas import tpu as pltpu
import numpy as np


def _round_up(x, m):
    return (x + m - 1) // m * m


def _cdiv(a, b):
    return (a + b - 1) // b


def _vmem_capacity_bytes():
    try:
        return int(pltpu.get_tpu_info().vmem_capacity_bytes)
    except Exception:
        return 64 << 20  # conservative fallback: v7x per-TensorCore VMEM


def _resample2d_kernel(img_ref, g_ref, out_ref, *, C_pad, H_pad, H_in, W_in,
                       matmul_dtype):
    # img_ref : (1, C_pad*H_pad, W_in)  matmul_dtype, zero-padded rows/channels,
    #            VMEM-resident across the Q tiles of a batch element.
    # g_ref   : (1, 2, qt)  f32; row 0 = normalized x, row 1 = normalized y.
    # out_ref : (1, C_pad, qt)
    img = img_ref[0]                                   # (C_pad*H_pad, W_in)
    g = g_ref[0]                                       # (2, qt)
    gx = g[0:1, :]
    gy = g[1:2, :]
    qt = gx.shape[-1]

    # Unnormalize (align_corners=False).  Clamp so floor/int32-cast can never
    # wrap a wildly out-of-range coordinate back into a valid index; the clamp
    # is transparent for in-range coordinates.
    x = jnp.clip(((gx + 1.0) * W_in - 1.0) * 0.5, -2.0, float(W_in + 1))
    y = jnp.clip(((gy + 1.0) * H_in - 1.0) * 0.5, -2.0, float(H_in + 1))

    x0f = jnp.floor(x)
    y0f = jnp.floor(y)
    wx1 = x - x0f
    wx0 = 1.0 - wx1
    wy1 = y - y0f
    wy0 = 1.0 - wy1
    x0 = x0f.astype(jnp.int32)
    y0 = y0f.astype(jnp.int32)
    x1 = x0 + 1
    y1 = y0 + 1

    # Separable one-hot interpolation operators (O((H_pad + W_in) * qt) compares).
    # Corners outside [0, W_in) / [0, H_in) never match the iota (padded H rows of
    # img are zero), which is exactly grid_sample's zeros-padding behaviour.
    iota_w = lax.broadcasted_iota(jnp.int32, (W_in, qt), 0)
    iota_h = lax.broadcasted_iota(jnp.int32, (H_pad, qt), 0)
    rx = jnp.where(iota_w == x0, wx0, 0.0) + jnp.where(iota_w == x1, wx1, 0.0)
    ry = jnp.where(iota_h == y0, wy0, 0.0) + jnp.where(iota_h == y1, wy1, 0.0)

    # Stage 1 (MXU): contract the W axis.  M = C_pad*H_pad keeps the MXU busy
    # even for tiny channel counts.
    tmp = jnp.dot(img, rx.astype(matmul_dtype),
                  preferred_element_type=jnp.float32)   # (C_pad*H_pad, qt) f32

    # Stage 2 (VPU multiply + sublane reduce): contract the H axis with the
    # per-pixel row weights.  H_pad % 8 == 0 -> the reshape is a re-tiling only.
    tmp3 = tmp.reshape(C_pad, H_pad, qt)
    out = jnp.sum(tmp3 * ry[None, :, :], axis=1)        # (C_pad, qt)
    out_ref[...] = out[None].astype(out_ref.dtype)


def resample2d(input1, input2, *, matmul_dtype=jnp.float32, out_dtype=None):
    """Pallas equivalent of Resample2d.forward (bilinear grid_sample, align_corners=False).

    matmul_dtype / out_dtype can be set to bfloat16 for ~2x HBM / MXU savings at
    ~1e-2 relative error on the interpolation weights (opt-in; default keeps f32
    so results match the f32 reference to 1e-4).
    """
    B, C, H_in, W_in = input1.shape
    B2, two, H_out, W_out = input2.shape
    assert B == B2 and two == 2
    out_dtype = input1.dtype if out_dtype is None else out_dtype

    Q = H_out * W_out
    C_pad = _round_up(C, 8)
    H_pad = _round_up(H_in, 8)

    # Feature map: pad C and H with zeros (zero rows/channels contribute nothing),
    # pre-cast to matmul_dtype once here (not per Q tile inside the kernel), and
    # lay it out as (B, C_pad*H_pad, W_in) so no in-kernel reshape of img is needed.
    img = input1.astype(matmul_dtype)
    if C_pad != C or H_pad != H_in:
        img = jnp.pad(img, ((0, 0), (0, C_pad - C), (0, H_pad - H_in), (0, 0)))
    img = img.reshape(B, C_pad * H_pad, W_in)

    grid2 = input2.reshape(B, 2, Q).astype(jnp.float32)

    # ---- Q tile sizing against the per-generation VMEM budget ----------------
    img_itemsize = jnp.dtype(matmul_dtype).itemsize
    out_itemsize = jnp.dtype(out_dtype).itemsize
    cap = _vmem_capacity_bytes()
    budget = int(0.70 * cap)          # ~45 MiB on v7x (64 MiB), ~90 MiB on v5e/v6e
    # Fixed cost: double-buffered resident feature map + slack for small temps.
    fixed = 2 * C_pad * H_pad * W_in * img_itemsize + (2 << 20)
    # Per-output-column cost of the two-stage path (stage-1 result + stage-2
    # temporaries + Rx/Ry/coordinate temps + grid/output double buffers).
    per_col = (4 * (3 * C_pad * H_pad)
               + 4 * (H_pad + W_in + 32)
               + 2 * 2 * 4
               + 2 * C_pad * out_itemsize)
    qt_max = max(128, (budget - fixed) // per_col // 128 * 128)
    qt_max = min(qt_max, _round_up(Q, 128))
    # Re-balance the tile so padding never nearly doubles Q_pad.
    num_q = _cdiv(Q, qt_max)
    qt = _round_up(_cdiv(Q, num_q), 128)
    Q_pad = num_q * qt

    if Q_pad != Q:
        # Padded coordinates (0.0) sample in-bounds pixels; those output columns
        # are sliced off below.
        grid2 = jnp.pad(grid2, ((0, 0), (0, 0), (0, Q_pad - Q)))

    cost = pl.CostEstimate(
        flops=int(2 * B * C_pad * H_pad * W_in * Q_pad
                  + 2 * B * C_pad * H_pad * Q_pad),
        transcendentals=0,
        bytes_accessed=int(img_itemsize * B * C_pad * H_pad * W_in
                           + 4 * B * 2 * Q_pad
                           + out_itemsize * B * C_pad * Q_pad),
    )

    out = pl.pallas_call(
        functools.partial(_resample2d_kernel, C_pad=C_pad, H_pad=H_pad,
                          H_in=H_in, W_in=W_in, matmul_dtype=matmul_dtype),
        out_shape=jax.ShapeDtypeStruct((B, C_pad, Q_pad), out_dtype),
        grid=(B, num_q),
        in_specs=[
            # Feature map: same block index across the Q axis -> VMEM resident.
            pl.BlockSpec((1, C_pad * H_pad, W_in), lambda b, q: (b, 0, 0)),
            # Packed (x, y) grid coordinates: one DMA per Q tile.
            pl.BlockSpec((1, 2, qt), lambda b, q: (b, 0, q)),
        ],
        out_specs=pl.BlockSpec((1, C_pad, qt), lambda b, q: (b, 0, q)),
        compiler_params=pltpu.CompilerParams(
            dimension_semantics=("parallel", "parallel"),
            # Hard limit below physical VMEM on every generation; tile sizing
            # above already targets the smaller 70% budget.
            vmem_limit_bytes=int(0.9 * cap),
        ),
        cost_estimate=cost,
    )(img, grid2)

    return out[:, :C, :Q].reshape(B, C, H_out, W_out)


def _grid_sample_ref(img, grid_x, grid_y):
    """Pure-JAX reference: bilinear grid_sample, align_corners=False, zeros padding."""
    B, C, H_in, W_in = img.shape
    x = ((grid_x + 1.0) * W_in - 1.0) * 0.5
    y = ((grid_y + 1.0) * H_in - 1.0) * 0.5
    x0 = jnp.floor(x)
    y0 = jnp.floor(y)
    wx1 = x - x0
    wx0 = 1.0 - wx1
    wy1 = y - y0
    wy0 = 1.0 - wy1
    x0i = x0.astype(jnp.int32)
    y0i = y0.astype(jnp.int32)
    x1i = x0i + 1
    y1i = y0i + 1

    def sample_one(im, xi, yi, w):
        valid = (xi >= 0) & (xi < W_in) & (yi >= 0) & (yi < H_in)
        xc = jnp.clip(xi, 0, W_in - 1)
        yc = jnp.clip(yi, 0, H_in - 1)
        vals = im[:, yc, xc]                            # (C, H_out, W_out)
        return vals * (w * valid)[None]

    def per_batch(im, x0i, x1i, y0i, y1i, wx0, wx1, wy0, wy1):
        return (sample_one(im, x0i, y0i, wx0 * wy0)
                + sample_one(im, x1i, y0i, wx1 * wy0)
                + sample_one(im, x0i, y1i, wx0 * wy1)
                + sample_one(im, x1i, y1i, wx1 * wy1))

    return jax.vmap(per_batch)(img, x0i, x1i, y0i, y1i, wx0, wx1, wy0, wy1)


if __name__ == "__main__":
    key = jax.random.PRNGKey(0)
    k1, k2, k3, k4, k5 = jax.random.split(key, 5)

    # Case 1: same input/output resolution.
    B, C, H, W = 2, 4, 16, 16
    input1 = jax.random.normal(k1, (B, C, H, W), dtype=jnp.float32)
    # Grid slightly outside [-1, 1] to exercise zeros-padding at the borders.
    input2 = jax.random.uniform(k2, (B, 2, H, W), dtype=jnp.float32,
                                minval=-1.2, maxval=1.2)
    out = jax.block_until_ready(resample2d(input1, input2))
    ref = _grid_sample_ref(input1, input2[:, 0], input2[:, 1])
    np.testing.assert_allclose(np.asarray(out), np.asarray(ref), atol=1e-4, rtol=1e-4)
    assert out.shape == (B, C, H, W)

    # Case 2: output resolution != input resolution, Q not a multiple of 128
    # (exercises lane padding / slicing and the Q-tile re-balance).
    H2, W2 = 12, 20
    input2b = jax.random.uniform(k3, (B, 2, H2, W2), dtype=jnp.float32,
                                 minval=-1.2, maxval=1.2)
    out2 = jax.block_until_ready(resample2d(input1, input2b))
    ref2 = _grid_sample_ref(input1, input2b[:, 0], input2b[:, 1])
    np.testing.assert_allclose(np.asarray(out2), np.asarray(ref2), atol=1e-4, rtol=1e-4)
    assert out2.shape == (B, C, H2, W2)

    # Case 3: input H not a multiple of 8 (exercises the zero-padded H rows in the
    # separable two-stage path).
    Hc, Wc = 12, 20
    input1c = jax.random.normal(k4, (B, C, Hc, Wc), dtype=jnp.float32)
    input2c = jax.random.uniform(k5, (B, 2, 10, 14), dtype=jnp.float32,
                                 minval=-1.2, maxval=1.2)
    out3 = jax.block_until_ready(resample2d(input1c, input2c))
    ref3 = _grid_sample_ref(input1c, input2c[:, 0], input2c[:, 1])
    np.testing.assert_allclose(np.asarray(out3), np.asarray(ref3), atol=1e-4, rtol=1e-4)
    assert out3.shape == (B, C, 10, 14)

    print("KERNEL_OK")
</pallas_src>

<mosaic_0001>
module attributes {stable_mosaic.version = 11 : i64} {
  func.func @_resample2d_kernel(%arg0: i32, %arg1: i32, %arg2: memref<1x128x16xf32, #tpu.memory_space<vmem>>, %arg3: memref<1x2x256xf32, #tpu.memory_space<vmem>>, %arg4: memref<1x8x256xf32, #tpu.memory_space<vmem>>) attributes {dimension_semantics = [#tpu.dimension_semantics<parallel>, #tpu.dimension_semantics<parallel>], iteration_bounds = array<i64: 2, 1>, scalar_prefetch = 0 : i64, scratch_operands = 0 : i64, tpu.core_type = #tpu.core_type<tc>, window_params = [{transform_indices = @transform_0, window_bounds = array<i64: 1, 128, 16>}, {transform_indices = @transform_1, window_bounds = array<i64: 1, 2, 256>}, {transform_indices = @transform_2, window_bounds = array<i64: 1, 8, 256>}]} {
    %c0 = arith.constant 0 : index
    %c0_0 = arith.constant 0 : index
    %c0_1 = arith.constant 0 : index
    %0 = vector.load %arg2[%c0, %c0_0, %c0_1] : memref<1x128x16xf32, #tpu.memory_space<vmem>>, vector<1x128x16xf32>
    %1 = vector.shape_cast %0 : vector<1x128x16xf32> to vector<128x16xf32>
    %c0_2 = arith.constant 0 : index
    %c0_3 = arith.constant 0 : index
    %c0_4 = arith.constant 0 : index
    %2 = vector.load %arg3[%c0_2, %c0_3, %c0_4] : memref<1x2x256xf32, #tpu.memory_space<vmem>>, vector<1x2x256xf32>
    %3 = vector.shape_cast %2 : vector<1x2x256xf32> to vector<2x256xf32>
    %4 = vector.extract_strided_slice %3 {offsets = [0, 0], sizes = [1, 256], strides = [1, 1]} : vector<2x256xf32> to vector<1x256xf32>
    %5 = vector.extract_strided_slice %3 {offsets = [1, 0], sizes = [1, 256], strides = [1, 1]} : vector<2x256xf32> to vector<1x256xf32>
    %cst = arith.constant 1.000000e+00 : f32
    %6 = vector.broadcast %cst : f32 to vector<1x256xf32>
    %7 = arith.addf %4, %6 : vector<1x256xf32>
    %cst_5 = arith.constant 1.600000e+01 : f32
    %8 = vector.broadcast %cst_5 : f32 to vector<1x256xf32>
    %9 = arith.mulf %7, %8 : vector<1x256xf32>
    %cst_6 = arith.constant 1.000000e+00 : f32
    %10 = vector.broadcast %cst_6 : f32 to vector<1x256xf32>
    %11 = arith.subf %9, %10 : vector<1x256xf32>
    %cst_7 = arith.constant 5.000000e-01 : f32
    %12 = vector.broadcast %cst_7 : f32 to vector<1x256xf32>
    %13 = arith.mulf %11, %12 : vector<1x256xf32>
    %cst_8 = arith.constant -2.000000e+00 : f32
    %cst_9 = arith.constant 1.700000e+01 : f32
    %14 = vector.broadcast %cst_8 : f32 to vector<1x256xf32>
    %15 = arith.maximumf %14, %13 : vector<1x256xf32>
    %16 = vector.broadcast %cst_9 : f32 to vector<1x256xf32>
    %17 = arith.minimumf %16, %15 : vector<1x256xf32>
    %cst_10 = arith.constant 1.000000e+00 : f32
    %18 = vector.broadcast %cst_10 : f32 to vector<1x256xf32>
    %19 = arith.addf %5, %18 : vector<1x256xf32>
    %cst_11 = arith.constant 1.600000e+01 : f32
    %20 = vector.broadcast %cst_11 : f32 to vector<1x256xf32>
    %21 = arith.mulf %19, %20 : vector<1x256xf32>
    %cst_12 = arith.constant 1.000000e+00 : f32
    %22 = vector.broadcast %cst_12 : f32 to vector<1x256xf32>
    %23 = arith.subf %21, %22 : vector<1x256xf32>
    %cst_13 = arith.constant 5.000000e-01 : f32
    %24 = vector.broadcast %cst_13 : f32 to vector<1x256xf32>
    %25 = arith.mulf %23, %24 : vector<1x256xf32>
    %cst_14 = arith.constant -2.000000e+00 : f32
    %cst_15 = arith.constant 1.700000e+01 : f32
    %26 = vector.broadcast %cst_14 : f32 to vector<1x256xf32>
    %27 = arith.maximumf %26, %25 : vector<1x256xf32>
    %28 = vector.broadcast %cst_15 : f32 to vector<1x256xf32>
    %29 = arith.minimumf %28, %27 : vector<1x256xf32>
    %30 = math.floor %17 : vector<1x256xf32>
    %31 = math.floor %29 : vector<1x256xf32>
    %32 = arith.subf %17, %30 : vector<1x256xf32>
    %cst_16 = arith.constant 1.000000e+00 : f32
    %33 = vector.broadcast %cst_16 : f32 to vector<1x256xf32>
    %34 = arith.subf %33, %32 : vector<1x256xf32>
    %35 = arith.subf %29, %31 : vector<1x256xf32>
    %cst_17 = arith.constant 1.000000e+00 : f32
    %36 = vector.broadcast %cst_17 : f32 to vector<1x256xf32>
    %37 = arith.subf %36, %35 : vector<1x256xf32>
    %38 = arith.fptosi %30 : vector<1x256xf32> to vector<1x256xi32>
    %39 = arith.fptosi %31 : vector<1x256xf32> to vector<1x256xi32>
    %c1_i32 = arith.constant 1 : i32
    %40 = vector.broadcast %c1_i32 : i32 to vector<1x256xi32>
    %41 = arith.addi %38, %40 : vector<1x256xi32>
    %c1_i32_18 = arith.constant 1 : i32
    %42 = vector.broadcast %c1_i32_18 : i32 to vector<1x256xi32>
    %43 = arith.addi %39, %42 : vector<1x256xi32>
    %44 = tpu.iota {dimensions = array<i32: 0>} : vector<16x256xi32>
    %45 = tpu.iota {dimensions = array<i32: 0>} : vector<16x256xi32>
    %46 = vector.broadcast %38 : vector<1x256xi32> to vector<16x256xi32>
    %47 = arith.cmpi eq, %44, %46 : vector<16x256xi32>
    %cst_19 = arith.constant 0.000000e+00 : f32
    %48 = vector.shape_cast %34 : vector<1x256xf32> to vector<1x256xf32>
    %49 = vector.broadcast %48 : vector<1x256xf32> to vector<16x256xf32>
    %50 = vector.broadcast %cst_19 : f32 to vector<16x256xf32>
    %51 = arith.select %47, %49, %50 : vector<16x256xi1>, vector<16x256xf32>
    %52 = vector.broadcast %41 : vector<1x256xi32> to vector<16x256xi32>
    %53 = arith.cmpi eq, %44, %52 : vector<16x256xi32>
    %cst_20 = arith.constant 0.000000e+00 : f32
    %54 = vector.shape_cast %32 : vector<1x256xf32> to vector<1x256xf32>
    %55 = vector.broadcast %54 : vector<1x256xf32> to vector<16x256xf32>
    %56 = vector.broadcast %cst_20 : f32 to vector<16x256xf32>
    %57 = arith.select %53, %55, %56 : vector<16x256xi1>, vector<16x256xf32>
    %58 = arith.addf %51, %57 : vector<16x256xf32>
    %59 = vector.broadcast %39 : vector<1x256xi32> to vector<16x256xi32>
    %60 = arith.cmpi eq, %45, %59 : vector<16x256xi32>
    %cst_21 = arith.constant 0.000000e+00 : f32
    %61 = vector.shape_cast %37 : vector<1x256xf32> to vector<1x256xf32>
    %62 = vector.broadcast %61 : vector<1x256xf32> to vector<16x256xf32>
    %63 = vector.broadcast %cst_21 : f32 to vector<16x256xf32>
    %64 = arith.select %60, %62, %63 : vector<16x256xi1>, vector<16x256xf32>
    %65 = vector.broadcast %43 : vector<1x256xi32> to vector<16x256xi32>
    %66 = arith.cmpi eq, %45, %65 : vector<16x256xi32>
    %cst_22 = arith.constant 0.000000e+00 : f32
    %67 = vector.shape_cast %35 : vector<1x256xf32> to vector<1x256xf32>
    %68 = vector.broadcast %67 : vector<1x256xf32> to vector<16x256xf32>
    %69 = vector.broadcast %cst_22 : f32 to vector<16x256xf32>
    %70 = arith.select %66, %68, %69 : vector<16x256xi1>, vector<16x256xf32>
    %71 = arith.addf %64, %70 : vector<16x256xf32>
    %cst_23 = arith.constant dense<0.000000e+00> : vector<128x256xf32>
    %72 = tpu.matmul %1, %58, %cst_23 {dimension_numbers = #tpu.dot_dimension_numbers<[1], [0], [0], [1], [0, 0, 1, 1], [], []>} : vector<128x16xf32>, vector<16x256xf32>, vector<128x256xf32> -> vector<128x256xf32>
    %73 = vector.shape_cast %72 : vector<128x256xf32> to vector<8x16x256xf32>
    %74 = vector.shape_cast %71 : vector<16x256xf32> to vector<1x16x256xf32>
    %75 = vector.broadcast %74 : vector<1x16x256xf32> to vector<8x16x256xf32>
    %76 = arith.mulf %73, %75 : vector<8x16x256xf32>
    %cst_24 = arith.constant dense<0.000000e+00> : vector<8x256xf32>
    %77 = vector.multi_reduction <add>, %76, %cst_24 [1] : vector<8x16x256xf32> to vector<8x256xf32>
    %78 = vector.shape_cast %77 : vector<8x256xf32> to vector<1x8x256xf32>
    %c0_25 = arith.constant 0 : index
    %c0_26 = arith.constant 0 : index
    %c0_27 = arith.constant 0 : index
    %79 = vector.load %arg4[%c0_25, %c0_26, %c0_27] : memref<1x8x256xf32, #tpu.memory_space<vmem>>, vector<1x8x256xf32>
    tpu.vector_store %arg4[%c0_25, %c0_26, %c0_27], %78 {strides = array<i32>} : memref<1x8x256xf32, #tpu.memory_space<vmem>>, vector<1x8x256xf32>,
    return
  }
  func.func @transform_0(%arg0: i32, %arg1: i32) -> (i32, i32, i32) {
    %c0_i32 = arith.constant 0 : i32
    %c0_i32_0 = arith.constant 0 : i32
    %c0_i32_1 = arith.constant 0 : i32
    return %arg0, %c0_i32, %c0_i32_0 : i32, i32, i32
  }
  func.func @transform_1(%arg0: i32, %arg1: i32) -> (i32, i32, i32) {
    %c0_i32 = arith.constant 0 : i32
    %c0_i32_0 = arith.constant 0 : i32
    return %arg0, %c0_i32, %arg1 : i32, i32, i32
  }
  func.func @transform_2(%arg0: i32, %arg1: i32) -> (i32, i32, i32) {
    %c0_i32 = arith.constant 0 : i32
    %c0_i32_0 = arith.constant 0 : i32
    return %arg0, %c0_i32, %arg1 : i32, i32, i32
  }
}

</mosaic_0001>

<llo_original>
// kernel: tpu_custom_call.1
$region0: #{tpu_custom_call.1}
  #allocation0 [shape = 'u32[]', space=smem, size = 0x4, offset = 0x4, fixed_abs, tag = 'smem constant byte address 0x4 - core index']
  #allocation1 [shape = 'u32[144,128]{1,0:T(1,128)}', space=vmem, size = 0x12000, scoped, tag = 'internal scratch']
  %s0 = inlined_call_operand.vmem [shape: f32[2,128,16], index: 0, kind: input, shape index: {}]
  %s1 = inlined_call_operand.vmem [shape: f32[2,2,256], index: 1, kind: input, shape index: {}]
  %s2 = inlined_call_operand.hbm [shape: f32[2,8,256], index: 2, kind: output, shape index: {}]
  %s3 = sld [smem:[#allocation0]]
  $region41: #{tpu_custom_call.1} parent=0
    _
  %s5 = ssub.s32 1, %s3
  %s6 = scalar_select 0, %s5, %s3
  $region1: #{tpu_custom_call.1} parent=0
    #allocation2 [shape = 'u8[16384]{0}', space=vmem, size = 0x4000, scoped, tag = 'output window, operand 0']
    #allocation3 [shape = 's32[2]{0}', space=sflag, size = 0x8, scoped, tag = 'scoped memory for tpu_custom_call.1']
    %7 = vsyncpa [#allocation3], 0
    %s8 = scalar_lea.sflag [#allocation3], 1
    %9 = vsyncpa %s8, 0
    loop: start=0, step=1, limit=4
    $region2: #{tpu_custom_call.1} parent=1 // loop_pre_header
      _
    $region3: #{tpu_custom_call.1} parent=1 // loop_header
      %s11 = sphi 0, %s15
      %p12 = scmp.ge.s32.totalorder %s11, 4
      %s18 = sphi 0, %s30
      %s19 = sphi 0, %s26
      %s20 = sphi 0, %s18
      %s21 = sphi 0, %s19
      %s22 = sphi 0, %s20
      %s23 = sphi 0, %s21
      %s33 = sphi 0, %s35
      %s36 = sphi 0, %s33
      %s37 = sphi 0, %s36
      %s53 = sphi 0, %s37
      %s61 = sphi 0, %s63
      %s64 = sphi 0, %s61
      %s65 = sphi 0, %s64
      %s81 = sphi 0, %s65
      %s89 = sphi 0, %s91
      %s92 = sphi 0, %s89
      %s93 = sphi 0, %s92
      %s109 = sphi 0, %s93
    $region4: #{tpu_custom_call.1} parent=1 // loop_header_branch
      %14 = sbr.rel (%p12) target = $region8
    $region5: #{tpu_custom_call.1} parent=1 // loop_body
      %s16 = ssub.s32 %s11, 1
      %s17 = ssub.s32 %s11, 2
      %s24 = sadd.s32 1, %s19
      %p25 = scmp.ge.s32.totalorder %s24, 1
      %s26 = scalar_select %p25, 0, %s24
      %s27 = sadd.s32 1, %s18
      %s28 = scalar_select %p25, %s27, %s18
      %p29 = scmp.ge.s32.totalorder %s28, 2
      %s30 = scalar_select %p29, 0, %s28
      %s31 = ssub.s32 %s18, %s30
      %p32 = scmp.eq.s32.totalorder %s31, 0
      %s34 = sadd.s32 %s33, 1
      %s35 = scalar_select %p32, %s33, %s34
      %p38 = pneg %p32
      %p39 = scmp.eq.s32.totalorder %s11, 1
      %p40 = por %p38, %p39
      %p41 = scmp.ne.s32.totalorder %s33, %s36
      %p42 = scmp.eq.s32.totalorder %s11, 0
      %p43 = por %p41, %p42
      %p44 = scmp.ne.s32.totalorder %s33, %s36
      %p45 = scmp.eq.s32.totalorder %s16, 1
      %p46 = por %p44, %p45
      %p47 = scmp.ne.s32.totalorder %s36, %s37
      %p48 = scmp.eq.s32.totalorder %s16, 0
      %p49 = por %p47, %p48
      %p50 = scmp.ne.s32.totalorder %s36, %s37
      %p51 = scmp.eq.s32.totalorder %s17, 1
      %p52 = por %p50, %p51
      %p54 = scmp.ne.s32.totalorder %s37, %s53
      %p55 = scmp.eq.s32.totalorder %s17, 0
      %p56 = por %p54, %p55
      %s57 = ssub.s32 %s18, %s30
      %s58 = ssub.s32 %s19, %s26
      %s59 = sor.u32 %s57, %s58
      %p60 = scmp.eq.s32.totalorder %s59, 0
      %s62 = sadd.s32 %s61, 1
      %s63 = scalar_select %p60, %s61, %s62
      %p66 = pneg %p60
      %p67 = scmp.eq.s32.totalorder %s11, 1
      %p68 = por %p66, %p67
      %p69 = scmp.ne.s32.totalorder %s61, %s64
      %p70 = scmp.eq.s32.totalorder %s11, 0
      %p71 = por %p69, %p70
      %p72 = scmp.ne.s32.totalorder %s61, %s64
      %p73 = scmp.eq.s32.totalorder %s16, 1
      %p74 = por %p72, %p73
      %p75 = scmp.ne.s32.totalorder %s64, %s65
      %p76 = scmp.eq.s32.totalorder %s16, 0
      %p77 = por %p75, %p76
      %p78 = scmp.ne.s32.totalorder %s64, %s65
      %p79 = scmp.eq.s32.totalorder %s17, 1
      %p80 = por %p78, %p79
      %p82 = scmp.ne.s32.totalorder %s65, %s81
      %p83 = scmp.eq.s32.totalorder %s17, 0
      %p84 = por %p82, %p83
      %s85 = ssub.s32 %s18, %s30
      %s86 = ssub.s32 %s19, %s26
      %s87 = sor.u32 %s85, %s86
      %p88 = scmp.eq.s32.totalorder %s87, 0
      %s90 = sadd.s32 %s89, 1
      %s91 = scalar_select %p88, %s89, %s90
      %p94 = pneg %p88
      %p95 = scmp.eq.s32.totalorder %s11, 1
      %p96 = por %p94, %p95
      %p97 = scmp.ne.s32.totalorder %s89, %s92
      %p98 = scmp.eq.s32.totalorder %s11, 0
      %p99 = por %p97, %p98
      %p100 = scmp.ne.s32.totalorder %s89, %s92
      %p101 = scmp.eq.s32.totalorder %s16, 1
      %p102 = por %p100, %p101
      %p103 = scmp.ne.s32.totalorder %s92, %s93
      %p104 = scmp.eq.s32.totalorder %s16, 0
      %p105 = por %p103, %p104
      %p106 = scmp.ne.s32.totalorder %s92, %s93
      %p107 = scmp.eq.s32.totalorder %s17, 1
      %p108 = por %p106, %p107
      %p110 = scmp.ne.s32.totalorder %s93, %s109
      %p111 = scmp.eq.s32.totalorder %s17, 0
      %p112 = por %p110, %p111
      %p113 = scmp.le.s32.totalorder 1, %s11
      %p114 = scmp.lt.s32.totalorder %s11, 3
      %p115 = pnand %p113, %p114
      %p116 = pneg %p115
      // Predicated region
      $region9: #{tpu_custom_call.1} parent=5 // pred_check
        _
      $region10: #{tpu_custom_call.1} parent=5 // pred_check_branch
        %118 = sbr.rel (%p115) target = $region12
      $region11: #{tpu_custom_call.1} parent=5 // pred_region
        %s119 = ssub.s32 %s11, 1
      $region12: #{tpu_custom_call.1} parent=5 // pred_fallthru
        _
      %p120 = scmp.lt.s32.totalorder %s11, 2
      // Predicated region
      $region13: #{tpu_custom_call.1} parent=5 // pred_check
        %p121 = pneg %p120
      $region14: #{tpu_custom_call.1} parent=5 // pred_check_branch
        %123 = sbr.rel (%p121) target = $region16
      $region15: #{tpu_custom_call.1} parent=5 // pred_region
        // Predicated region
        $region17: #{tpu_custom_call.1} parent=15 // pred_check
          %p124 = pneg %p43
        $region18: #{tpu_custom_call.1} parent=15 // pred_check_branch
          %126 = sbr.rel (%p124) target = $region20
        $region19: #{tpu_custom_call.1} parent=15 // pred_region
          %p127 = scmp.lt.s32.totalorder %s18, 1
          %s128 = scalar_select %p127, %s18, 1
          %s129 = smul.addr %s128, 16
          %s130 = smul.addr %s129, 8
          %s131 = scalar_lea.vmem %s0, %s130
        $region20: #{tpu_custom_call.1} parent=15 // pred_fallthru
          _
        // Predicated region
        $region21: #{tpu_custom_call.1} parent=15 // pred_check
          %p132 = pneg %p71
        $region22: #{tpu_custom_call.1} parent=15 // pred_check_branch
          %134 = sbr.rel (%p132) target = $region24
        $region23: #{tpu_custom_call.1} parent=15 // pred_region
          %s135 = smul.u32 2, %s19
          %p136 = scmp.lt.s32.totalorder %s18, 1
          %s137 = scalar_select %p136, %s18, 1
          %p138 = scmp.lt.s32.totalorder %s135, 1
          %s139 = scalar_select %p138, %s135, 1
          %s140 = smul.addr %s137, 2
          %s141 = sadd.s32 %s139, %s140
          %s142 = smul.addr %s141, 2
          %s143 = scalar_lea.vmem %s1, %s142
          %s144 = smul.u32 2, %s19
        $region24: #{tpu_custom_call.1} parent=15 // pred_fallthru
          _
      $region16: #{tpu_custom_call.1} parent=5 // pred_fallthru
        _
      %p145 = scmp.le.s32.totalorder 1, %s11
      %p146 = scmp.lt.s32.totalorder %s11, 3
      %p147 = pnand %p145, %p146
      %p148 = pneg %p147
      // Predicated region
      $region25: #{tpu_custom_call.1} parent=5 // pred_check
        _
      $region26: #{tpu_custom_call.1} parent=5 // pred_check_branch
        %150 = sbr.rel (%p147) target = $region28
      $region27: #{tpu_custom_call.1} parent=5 // pred_region
        %s151 = ssub.s32 %s11, 1
        %p152 = scmp.lt.s32.totalorder %s20, 1
        %s153 = scalar_select %p152, %s20, 1
        %s154 = smul.addr %s153, 16
        %s155 = smul.addr %s154, 8
        %s156 = scalar_lea.vmem %s0, %s155
        %p157 = pneg %p49
        %p158 = pneg %p46
        %s159 = smul.u32 2, %s21
        %p160 = scmp.lt.s32.totalorder %s20, 1
        %s161 = scalar_select %p160, %s20, 1
        %p162 = scmp.lt.s32.totalorder %s159, 1
        %s163 = scalar_select %p162, %s159, 1
        %s164 = smul.addr %s161, 2
        %s165 = sadd.s32 %s163, %s164
        %s166 = smul.addr %s165, 2
        %s167 = scalar_lea.vmem %s1, %s166
        %p168 = pneg %p77
        %p169 = pneg %p74
        %p170 = pneg %p105
        %p171 = pneg %p102
        %s172 = sand.u32 %s92, 1
        %s173 = scalar_lea.sflag [#allocation3], %s172
        %s174 = sand.u32 %s92, 1
        %s175 = smul.addr %s174, 16
        %s176 = scalar_lea.vmem [#allocation2], %s175
        %p177 = scmp.lt.s32.totalorder %s20, 1
        %s178 = scalar_select %p177, %s20, 1
        %s179 = smul.addr %s178, 16
        %s180 = smul.addr %s179, 8
        %s181 = scalar_lea.vmem %s0, %s180
        %s182 = smul.u32 2, %s21
        %p183 = scmp.lt.s32.totalorder %s20, 1
        %s184 = scalar_select %p183, %s20, 1
        %p185 = scmp.lt.s32.totalorder %s182, 1
        %s186 = scalar_select %p185, %s182, 1
        %s187 = smul.addr %s184, 2
        %s188 = sadd.s32 %s186, %s187
        %s189 = smul.addr %s188, 2
        %s190 = scalar_lea.vmem %s1, %s189
        %s191 = smul.u32 2, %s21
        %s192 = smul.u32 2, %s21
        %v193 = vld [vmem:[%s181] sm:$0xff]
        %v194 = vld [vmem:[%s181 + $0x8] sm:$0xff]
        %v195 = vld [vmem:[%s181 + $0x10] sm:$0xff]
        %v196 = vld [vmem:[%s181 + $0x18] sm:$0xff]
        %v197 = vld [vmem:[%s181 + $0x20] sm:$0xff]
        %v198 = vld [vmem:[%s181 + $0x28] sm:$0xff]
        %v199 = vld [vmem:[%s181 + $0x30] sm:$0xff]
        %v200 = vld [vmem:[%s181 + $0x38] sm:$0xff]
        %v201 = vld [vmem:[%s181 + $0x40] sm:$0xff]
        %v202 = vld [vmem:[%s181 + $0x48] sm:$0xff]
        %v203 = vld [vmem:[%s181 + $0x50] sm:$0xff]
        %v204 = vld [vmem:[%s181 + $0x58] sm:$0xff]
        %v205 = vld [vmem:[%s181 + $0x60] sm:$0xff]
        %v206 = vld [vmem:[%s181 + $0x68] sm:$0xff]
        %v207 = vld [vmem:[%s181 + $0x70] sm:$0xff]
        %v208 = vld [vmem:[%s181 + $0x78] sm:$0xff]
        %v209 = vld [vmem:[%s190] sm:$0xf]
        %v210 = vadd.f32 %v209, 1.0
        %v211 = vmul.f32 %v210, 16.0
        %v212 = vsub.f32 %v211, 1.0
        %v213 = vmul.f32 %v212, 0.5
        %v214 = vmax.f32 %v213, -2.0
        %v215 = vmin.f32 %v214, 17.0
        %v216 = vfloor.f32 %v215
        %v217 = vsub.f32 %v215, %v216
        %v218 = vsub.f32 1.0, %v217
        %v219 = vcvt.f32.s32.to.zero.pseudo %v216
        %v220 = vadd.s32 %v219, 1
        %v221 = vlaneseq
        %v222 = vshrl.u32 %v221, 7
        %v223 = vadd.s32 %v222, 8
        %v224 = vlaneseq
        %v225 = vshrl.u32 %v224, 7
        %v226 = vsub.s32 0, %v225
        %v227 = vrot.slane %v219, %v226
        %v228 = vlaneseq
        %v229 = vshrl.u32 %v228, 7
        %v230 = vsub.s32 2, %v229
        %v231 = vrot.slane %v219, %v230
        %v232 = vlaneseq
        %v233 = vshrl.u32 %v232, 7
        %v234 = vsub.s32 0, %v233
        %v235 = vrot.slane %v227, %v234
        %v236 = vlaneseq
        %v237 = vshrl.u32 %v236, 7
        %v238 = vsub.s32 0, %v237
        %v239 = vrot.slane %v231, %v238
        %vm240 = vcmp.eq.s32.totalorder %v222, %v235
        %vm241 = vcmp.eq.s32.totalorder %v222, %v239
        %vm242 = vcmp.eq.s32.totalorder %v223, %v235
        %vm243 = vcmp.eq.s32.totalorder %v223, %v239
        %v245 = vlaneseq
        %v246 = vshrl.u32 %v245, 7
        %v247 = vsub.s32 0, %v246
        %v248 = vrot.slane %v218, %v247
        %v249 = vlaneseq
        %v250 = vshrl.u32 %v249, 7
        %v251 = vsub.s32 2, %v250
        %v252 = vrot.slane %v218, %v251
        %v255 = vlaneseq
        %v256 = vshrl.u32 %v255, 7
        %v257 = vsub.s32 0, %v256
        %v258 = vrot.slane %v248, %v257
        %v259 = vlaneseq
        %v260 = vshrl.u32 %v259, 7
        %v261 = vsub.s32 0, %v260
        %v262 = vrot.slane %v252, %v261
        %v263 = vsel %vm240, %v258, 0.0
        %v264 = vsel %vm241, %v262, 0.0
        %v265 = vsel %vm242, %v258, 0.0
        %v266 = vsel %vm243, %v262, 0.0
        %v267 = vlaneseq
        %v268 = vshrl.u32 %v267, 7
        %v269 = vsub.s32 0, %v268
        %v270 = vrot.slane %v220, %v269
        %v271 = vlaneseq
        %v272 = vshrl.u32 %v271, 7
        %v273 = vsub.s32 2, %v272
        %v274 = vrot.slane %v220, %v273
        %v275 = vlaneseq
        %v276 = vshrl.u32 %v275, 7
        %v277 = vsub.s32 0, %v276
        %v278 = vrot.slane %v270, %v277
        %v279 = vlaneseq
        %v280 = vshrl.u32 %v279, 7
        %v281 = vsub.s32 0, %v280
        %v282 = vrot.slane %v274, %v281
        %vm283 = vcmp.eq.s32.totalorder %v222, %v278
        %vm284 = vcmp.eq.s32.totalorder %v222, %v282
        %vm285 = vcmp.eq.s32.totalorder %v223, %v278
        %vm286 = vcmp.eq.s32.totalorder %v223, %v282
        %v288 = vlaneseq
        %v289 = vshrl.u32 %v288, 7
        %v290 = vsub.s32 0, %v289
        %v291 = vrot.slane %v217, %v290
        %v292 = vlaneseq
        %v293 = vshrl.u32 %v292, 7
        %v294 = vsub.s32 2, %v293
        %v295 = vrot.slane %v217, %v294
        %v298 = vlaneseq
        %v299 = vshrl.u32 %v298, 7
        %v300 = vsub.s32 0, %v299
        %v301 = vrot.slane %v291, %v300
        %v302 = vlaneseq
        %v303 = vshrl.u32 %v302, 7
        %v304 = vsub.s32 0, %v303
        %v305 = vrot.slane %v295, %v304
        %v306 = vsel %vm283, %v301, 0.0
        %v307 = vsel %vm284, %v305, 0.0
        %v308 = vsel %vm285, %v301, 0.0
        %v309 = vsel %vm286, %v305, 0.0
        %v310 = vadd.f32 %v263, %v306
        %v311 = vadd.f32 %v264, %v307
        %v312 = vadd.f32 %v265, %v308
        %v313 = vadd.f32 %v266, %v309
        %v314 = vlaneseq
        %v315 = vshrl.u32 %v314, 7
        %v316 = vsub.s32 1, %v315
        %v317 = vrot.slane %v219, %v316
        %v318 = vlaneseq
        %v319 = vshrl.u32 %v318, 7
        %v320 = vsub.s32 3, %v319
        %v321 = vrot.slane %v219, %v320
        %v322 = vlaneseq
        %v323 = vshrl.u32 %v322, 7
        %v324 = vsub.s32 1, %v323
        %v325 = vrot.slane %v317, %v324
        %v326 = vlaneseq
        %v327 = vshrl.u32 %v326, 7
        %v328 = vsub.s32 1, %v327
        %v329 = vrot.slane %v321, %v328
        %vm330 = vcmp.eq.s32.totalorder %v222, %v325
        %vm331 = vcmp.eq.s32.totalorder %v222, %v329
        %vm332 = vcmp.eq.s32.totalorder %v223, %v325
        %vm333 = vcmp.eq.s32.totalorder %v223, %v329
        %v334 = vlaneseq
        %v335 = vshrl.u32 %v334, 7
        %v336 = vsub.s32 1, %v335
        %v337 = vrot.slane %v218, %v336
        %v338 = vlaneseq
        %v339 = vshrl.u32 %v338, 7
        %v340 = vsub.s32 3, %v339
        %v341 = vrot.slane %v218, %v340
        %v344 = vlaneseq
        %v345 = vshrl.u32 %v344, 7
        %v346 = vsub.s32 1, %v345
        %v347 = vrot.slane %v337, %v346
        %v348 = vlaneseq
        %v349 = vshrl.u32 %v348, 7
        %v350 = vsub.s32 1, %v349
        %v351 = vrot.slane %v341, %v350
        %v352 = vsel %vm330, %v347, 0.0
        %v353 = vsel %vm331, %v351, 0.0
        %v354 = vsel %vm332, %v347, 0.0
        %v355 = vsel %vm333, %v351, 0.0
        %v356 = vlaneseq
        %v357 = vshrl.u32 %v356, 7
        %v358 = vsub.s32 1, %v357
        %v359 = vrot.slane %v220, %v358
        %v360 = vlaneseq
        %v361 = vshrl.u32 %v360, 7
        %v362 = vsub.s32 3, %v361
        %v363 = vrot.slane %v220, %v362
        %v364 = vlaneseq
        %v365 = vshrl.u32 %v364, 7
        %v366 = vsub.s32 1, %v365
        %v367 = vrot.slane %v359, %v366
        %v368 = vlaneseq
        %v369 = vshrl.u32 %v368, 7
        %v370 = vsub.s32 1, %v369
        %v371 = vrot.slane %v363, %v370
        %vm372 = vcmp.eq.s32.totalorder %v222, %v367
        %vm373 = vcmp.eq.s32.totalorder %v222, %v371
        %vm374 = vcmp.eq.s32.totalorder %v223, %v367
        %vm375 = vcmp.eq.s32.totalorder %v223, %v371
        %v376 = vlaneseq
        %v377 = vshrl.u32 %v376, 7
        %v378 = vsub.s32 1, %v377
        %v379 = vrot.slane %v217, %v378
        %v380 = vlaneseq
        %v381 = vshrl.u32 %v380, 7
        %v382 = vsub.s32 3, %v381
        %v383 = vrot.slane %v217, %v382
        %v386 = vlaneseq
        %v387 = vshrl.u32 %v386, 7
        %v388 = vsub.s32 1, %v387
        %v389 = vrot.slane %v379, %v388
        %v390 = vlaneseq
        %v391 = vshrl.u32 %v390, 7
        %v392 = vsub.s32 1, %v391
        %v393 = vrot.slane %v383, %v392
        %v394 = vsel %vm372, %v389, 0.0
        %v395 = vsel %vm373, %v393, 0.0
        %v396 = vsel %vm374, %v389, 0.0
        %v397 = vsel %vm375, %v393, 0.0
        %v398 = vadd.f32 %v352, %v394
        %v399 = vadd.f32 %v353, %v395
        %v400 = vadd.f32 %v354, %v396
        %v401 = vadd.f32 %v355, %v397
        %vm402 = vcmask 130048
        %v404 = vsel %vm402, %v193, 0
        %v407 = vsel %vm402, %v194, 0
        %v410 = vsel %vm402, %v195, 0
        %v413 = vsel %vm402, %v196, 0
        %v416 = vsel %vm402, %v197, 0
        %v419 = vsel %vm402, %v198, 0
        %v422 = vsel %vm402, %v199, 0
        %v425 = vsel %vm402, %v200, 0
        %v428 = vsel %vm402, %v201, 0
        %v431 = vsel %vm402, %v202, 0
        %v434 = vsel %vm402, %v203, 0
        %v437 = vsel %vm402, %v204, 0
        %v440 = vsel %vm402, %v205, 0
        %v443 = vsel %vm402, %v206, 0
        %v446 = vsel %vm402, %v207, 0
        %v449 = vsel %vm402, %v208, 0
        %451 = vmatprep.subr.mxu0 0.0
        %452 = vmatpush1.msra.mxu0 0.0
        %453 = vmatprep.subr.mxu0 0.0
        %454 = vmatpush1.msra.mxu0 0.0
        %455 = vmatprep.subr.mxu0 0.0
        %456 = vmatpush1.msra.mxu0 0.0
        %457 = vmatprep.subr.mxu0 0.0
        %458 = vmatpush1.msra.mxu0 0.0
        %459 = vmatprep.subr.mxu0 0.0
        %460 = vmatpush1.msra.mxu0 0.0
        %461 = vmatprep.subr.mxu0 0.0
        %462 = vmatpush1.msra.mxu0 0.0
        %463 = vmatprep.subr.mxu0 0.0
        %464 = vmatpush1.msra.mxu0 0.0
        %465 = vmatprep.subr.mxu0 0.0
        %466 = vmatpush1.msra.mxu0 0.0
        %467 = vmatprep.subr.mxu0 0.0
        %468 = vmatpush1.msra.mxu0 0.0
        %469 = vmatprep.subr.mxu0 0.0
        %470 = vmatpush1.msra.mxu0 0.0
        %471 = vmatprep.subr.mxu0 0.0
        %472 = vmatpush1.msra.mxu0 0.0
        %473 = vmatprep.subr.mxu0 0.0
        %474 = vmatpush1.msra.mxu0 0.0
        %475 = vmatprep.subr.mxu0 0.0
        %476 = vmatpush1.msra.mxu0 0.0
        %477 = vmatprep.subr.mxu0 0.0
        %478 = vmatpush1.msra.mxu0 0.0
        %479 = vmatprep.subr.mxu0 %v313
        %480 = vmatpush1.msra.mxu0 %v312
        %481 = vmatprep.subr.mxu0 %v311
        %482 = vmatpush1.msra.mxu0 %v310
        %483 = vmatprep.subr.mxu0 0.0
        %484 = vmatpush2.msra.mxu0 0.0
        %485 = vmatprep.subr.mxu0 0.0
        %486 = vmatpush2.msra.mxu0 0.0
        %487 = vmatprep.subr.mxu0 0.0
        %488 = vmatpush2.msra.mxu0 0.0
        %489 = vmatprep.subr.mxu0 0.0
        %490 = vmatpush2.msra.mxu0 0.0
        %491 = vmatprep.subr.mxu0 0.0
        %492 = vmatpush2.msra.mxu0 0.0
        %493 = vmatprep.subr.mxu0 0.0
        %494 = vmatpush2.msra.mxu0 0.0
        %495 = vmatprep.subr.mxu0 0.0
        %496 = vmatpush2.msra.mxu0 0.0
        %497 = vmatprep.subr.mxu0 0.0
        %498 = vmatpush2.msra.mxu0 0.0
        %499 = vmatprep.subr.mxu0 0.0
        %500 = vmatpush2.msra.mxu0 0.0
        %501 = vmatprep.subr.mxu0 0.0
        %502 = vmatpush2.msra.mxu0 0.0
        %503 = vmatprep.subr.mxu0 0.0
        %504 = vmatpush2.msra.mxu0 0.0
        %505 = vmatprep.subr.mxu0 0.0
        %506 = vmatpush2.msra.mxu0 0.0
        %507 = vmatprep.subr.mxu0 0.0
        %508 = vmatpush2.msra.mxu0 0.0
        %509 = vmatprep.subr.mxu0 0.0
        %510 = vmatpush2.msra.mxu0 0.0
        %511 = vmatprep.subr.mxu0 0.0
        %512 = vmatpush2.msra.mxu0 0.0
        %513 = vmatprep.subr.mxu0 0.0
        %514 = vmatpush2.msra.mxu0 0.0
        %515 = vmatprep.mubr.f32.mxu0 0.0
        %516 = vmatmul.mubr.f32.gmra.mxu0 %v404
        %v517 = vpop.f32.mrf.mxu0
        %v518 = vadd.f32 0.0, %v517
        %v519 = vpop.f32.mrf.mxu0
        %v520 = vadd.f32 0.0, %v519
        %521 = vmatprep.mubr.f32.mxu0 0.0
        %522 = vmatmul.mubr.f32.gmra.mxu0 %v407
        %v523 = vpop.f32.mrf.mxu0
        %v524 = vadd.f32 0.0, %v523
        %v525 = vpop.f32.mrf.mxu0
        %v526 = vadd.f32 0.0, %v525
        %527 = vmatprep.mubr.f32.mxu0 0.0
        %528 = vmatmul.mubr.f32.gmra.mxu0 %v410
        %v529 = vpop.f32.mrf.mxu0
        %v530 = vadd.f32 0.0, %v529
        %v531 = vpop.f32.mrf.mxu0
        %v532 = vadd.f32 0.0, %v531
        %533 = vmatprep.mubr.f32.mxu0 0.0
        %534 = vmatmul.mubr.f32.gmra.mxu0 %v413
        %v535 = vpop.f32.mrf.mxu0
        %v536 = vadd.f32 0.0, %v535
        %v537 = vpop.f32.mrf.mxu0
        %v538 = vadd.f32 0.0, %v537
        %539 = vmatprep.mubr.f32.mxu0 0.0
        %540 = vmatmul.mubr.f32.gmra.mxu0 %v416
        %v541 = vpop.f32.mrf.mxu0
        %v542 = vadd.f32 0.0, %v541
        %v543 = vpop.f32.mrf.mxu0
        %v544 = vadd.f32 0.0, %v543
        %545 = vmatprep.mubr.f32.mxu0 0.0
        %546 = vmatmul.mubr.f32.gmra.mxu0 %v419
        %v547 = vpop.f32.mrf.mxu0
        %v548 = vadd.f32 0.0, %v547
        %v549 = vpop.f32.mrf.mxu0
        %v550 = vadd.f32 0.0, %v549
        %551 = vmatprep.mubr.f32.mxu0 0.0
        %552 = vmatmul.mubr.f32.gmra.mxu0 %v422
        %v553 = vpop.f32.mrf.mxu0
        %v554 = vadd.f32 0.0, %v553
        %v555 = vpop.f32.mrf.mxu0
        %v556 = vadd.f32 0.0, %v555
        %557 = vmatprep.mubr.f32.mxu0 0.0
        %558 = vmatmul.mubr.f32.gmra.mxu0 %v425
        %v559 = vpop.f32.mrf.mxu0
        %v560 = vadd.f32 0.0, %v559
        %v561 = vpop.f32.mrf.mxu0
        %v562 = vadd.f32 0.0, %v561
        %563 = vmatprep.mubr.f32.mxu0 0.0
        %564 = vmatmul.mubr.f32.gmra.mxu0 %v428
        %v565 = vpop.f32.mrf.mxu0
        %v566 = vadd.f32 0.0, %v565
        %v567 = vpop.f32.mrf.mxu0
        %v568 = vadd.f32 0.0, %v567
        %569 = vmatprep.mubr.f32.mxu0 0.0
        %570 = vmatmul.mubr.f32.gmra.mxu0 %v431
        %v571 = vpop.f32.mrf.mxu0
        %v572 = vadd.f32 0.0, %v571
        %v573 = vpop.f32.mrf.mxu0
        %v574 = vadd.f32 0.0, %v573
        %575 = vmatprep.mubr.f32.mxu0 0.0
        %576 = vmatmul.mubr.f32.gmra.mxu0 %v434
        %v577 = vpop.f32.mrf.mxu0
        %v578 = vadd.f32 0.0, %v577
        %v579 = vpop.f32.mrf.mxu0
        %v580 = vadd.f32 0.0, %v579
        %581 = vmatprep.mubr.f32.mxu0 0.0
        %582 = vmatmul.mubr.f32.gmra.mxu0 %v437
        %v583 = vpop.f32.mrf.mxu0
        %v584 = vadd.f32 0.0, %v583
        %v585 = vpop.f32.mrf.mxu0
        %v586 = vadd.f32 0.0, %v585
        %587 = vmatprep.mubr.f32.mxu0 0.0
        %588 = vmatmul.mubr.f32.gmra.mxu0 %v440
        %v589 = vpop.f32.mrf.mxu0
        %v590 = vadd.f32 0.0, %v589
        %v591 = vpop.f32.mrf.mxu0
        %v592 = vadd.f32 0.0, %v591
        %593 = vmatprep.mubr.f32.mxu0 0.0
        %594 = vmatmul.mubr.f32.gmra.mxu0 %v443
        %v595 = vpop.f32.mrf.mxu0
        %v596 = vadd.f32 0.0, %v595
        %v597 = vpop.f32.mrf.mxu0
        %v598 = vadd.f32 0.0, %v597
        %599 = vmatprep.mubr.f32.mxu0 0.0
        %600 = vmatmul.mubr.f32.gmra.mxu0 %v446
        %v601 = vpop.f32.mrf.mxu0
        %v602 = vadd.f32 0.0, %v601
        %v603 = vpop.f32.mrf.mxu0
        %v604 = vadd.f32 0.0, %v603
        %605 = vmatprep.mubr.f32.mxu0 0.0
        %606 = vmatmul.mubr.f32.gmra.mxu0 %v449
        %v607 = vpop.f32.mrf.mxu0
        %v608 = vadd.f32 0.0, %v607
        %v609 = vpop.f32.mrf.mxu0
        %v610 = vadd.f32 0.0, %v609
        %611 = vdwg.mxu0
        %v612 = vmul.f32 %v518, %v398
        %v613 = vmul.f32 %v520, %v399
        %v614 = vmul.f32 %v524, %v400
        %v615 = vmul.f32 %v526, %v401
        %v616 = vmul.f32 %v530, %v398
        %v617 = vmul.f32 %v532, %v399
        %v618 = vmul.f32 %v536, %v400
        %v619 = vmul.f32 %v538, %v401
        %v620 = vmul.f32 %v542, %v398
        %v621 = vmul.f32 %v544, %v399
        %v622 = vmul.f32 %v548, %v400
        %v623 = vmul.f32 %v550, %v401
        %v624 = vmul.f32 %v554, %v398
        %v625 = vmul.f32 %v556, %v399
        %v626 = vmul.f32 %v560, %v400
        %v627 = vmul.f32 %v562, %v401
        %v628 = vmul.f32 %v566, %v398
        %v629 = vmul.f32 %v568, %v399
        %v630 = vmul.f32 %v572, %v400
        %v631 = vmul.f32 %v574, %v401
        %v632 = vmul.f32 %v578, %v398
        %v633 = vmul.f32 %v580, %v399
        %v634 = vmul.f32 %v584, %v400
        %v635 = vmul.f32 %v586, %v401
        %v636 = vmul.f32 %v590, %v398
        %v637 = vmul.f32 %v592, %v399
        %v638 = vmul.f32 %v596, %v400
        %v639 = vmul.f32 %v598, %v401
        %v640 = vmul.f32 %v602, %v398
        %v641 = vmul.f32 %v604, %v399
        %v642 = vmul.f32 %v608, %v400
        %v643 = vmul.f32 %v610, %v401
        %v644 = vadd.f32 %v612, %v614
        %v645 = vrot.slane %v644, 4
        %v646 = vadd.f32 %v644, %v645
        %v647 = vrot.slane %v646, 2
        %v648 = vadd.f32 %v646, %v647
        %v649 = vrot.slane %v648, 1
        %v650 = vadd.f32 %v648, %v649
        %v651 = vadd.f32 %v613, %v615
        %v652 = vrot.slane %v651, 4
        %v653 = vadd.f32 %v651, %v652
        %v654 = vrot.slane %v653, 2
        %v655 = vadd.f32 %v653, %v654
        %v656 = vrot.slane %v655, 1
        %v657 = vadd.f32 %v655, %v656
        %v658 = vadd.f32 %v616, %v618
        %v659 = vrot.slane %v658, 4
        %v660 = vadd.f32 %v658, %v659
        %v661 = vrot.slane %v660, 2
        %v662 = vadd.f32 %v660, %v661
        %v663 = vrot.slane %v662, 1
        %v664 = vadd.f32 %v662, %v663
        %v665 = vadd.f32 %v617, %v619
        %v666 = vrot.slane %v665, 4
        %v667 = vadd.f32 %v665, %v666
        %v668 = vrot.slane %v667, 2
        %v669 = vadd.f32 %v667, %v668
        %v670 = vrot.slane %v669, 1
        %v671 = vadd.f32 %v669, %v670
        %v672 = vadd.f32 %v620, %v622
        %v673 = vrot.slane %v672, 4
        %v674 = vadd.f32 %v672, %v673
        %v675 = vrot.slane %v674, 2
        %v676 = vadd.f32 %v674, %v675
        %v677 = vrot.slane %v676, 1
        %v678 = vadd.f32 %v676, %v677
        %v679 = vadd.f32 %v621, %v623
        %v680 = vrot.slane %v679, 4
        %v681 = vadd.f32 %v679, %v680
        %v682 = vrot.slane %v681, 2
        %v683 = vadd.f32 %v681, %v682
        %v684 = vrot.slane %v683, 1
        %v685 = vadd.f32 %v683, %v684
        %v686 = vadd.f32 %v624, %v626
        %v687 = vrot.slane %v686, 4
        %v688 = vadd.f32 %v686, %v687
        %v689 = vrot.slane %v688, 2
        %v690 = vadd.f32 %v688, %v689
        %v691 = vrot.slane %v690, 1
        %v692 = vadd.f32 %v690, %v691
        %v693 = vadd.f32 %v625, %v627
        %v694 = vrot.slane %v693, 4
        %v695 = vadd.f32 %v693, %v694
        %v696 = vrot.slane %v695, 2
        %v697 = vadd.f32 %v695, %v696
        %v698 = vrot.slane %v697, 1
        %v699 = vadd.f32 %v697, %v698
        %v700 = vadd.f32 %v628, %v630
        %v701 = vrot.slane %v700, 4
        %v702 = vadd.f32 %v700, %v701
        %v703 = vrot.slane %v702, 2
        %v704 = vadd.f32 %v702, %v703
        %v705 = vrot.slane %v704, 1
        %v706 = vadd.f32 %v704, %v705
        %v707 = vadd.f32 %v629, %v631
        %v708 = vrot.slane %v707, 4
        %v709 = vadd.f32 %v707, %v708
        %v710 = vrot.slane %v709, 2
        %v711 = vadd.f32 %v709, %v710
        %v712 = vrot.slane %v711, 1
        %v713 = vadd.f32 %v711, %v712
        %v714 = vadd.f32 %v632, %v634
        %v715 = vrot.slane %v714, 4
        %v716 = vadd.f32 %v714, %v715
        %v717 = vrot.slane %v716, 2
        %v718 = vadd.f32 %v716, %v717
        %v719 = vrot.slane %v718, 1
        %v720 = vadd.f32 %v718, %v719
        %v721 = vadd.f32 %v633, %v635
        %v722 = vrot.slane %v721, 4
        %v723 = vadd.f32 %v721, %v722
        %v724 = vrot.slane %v723, 2
        %v725 = vadd.f32 %v723, %v724
        %v726 = vrot.slane %v725, 1
        %v727 = vadd.f32 %v725, %v726
        %v728 = vadd.f32 %v636, %v638
        %v729 = vrot.slane %v728, 4
        %v730 = vadd.f32 %v728, %v729
        %v731 = vrot.slane %v730, 2
        %v732 = vadd.f32 %v730, %v731
        %v733 = vrot.slane %v732, 1
        %v734 = vadd.f32 %v732, %v733
        %v735 = vadd.f32 %v637, %v639
        %v736 = vrot.slane %v735, 4
        %v737 = vadd.f32 %v735, %v736
        %v738 = vrot.slane %v737, 2
        %v739 = vadd.f32 %v737, %v738
        %v740 = vrot.slane %v739, 1
        %v741 = vadd.f32 %v739, %v740
        %v742 = vadd.f32 %v640, %v642
        %v743 = vrot.slane %v742, 4
        %v744 = vadd.f32 %v742, %v743
        %v745 = vrot.slane %v744, 2
        %v746 = vadd.f32 %v744, %v745
        %v747 = vrot.slane %v746, 1
        %v748 = vadd.f32 %v746, %v747
        %v749 = vadd.f32 %v641, %v643
        %v750 = vrot.slane %v749, 4
        %v751 = vadd.f32 %v749, %v750
        %v752 = vrot.slane %v751, 2
        %v753 = vadd.f32 %v751, %v752
        %v754 = vrot.slane %v753, 1
        %v755 = vadd.f32 %v753, %v754
        %vm772 = vcmask 1041409
        %v773 = vsel %vm772, %v664, %v650
        %vm774 = vcmask 1042434
        %v775 = vsel %vm774, %v678, %v773
        %vm776 = vcmask 1043459
        %v777 = vsel %vm776, %v692, %v775
        %vm778 = vcmask 1044484
        %v779 = vsel %vm778, %v706, %v777
        %vm780 = vcmask 1045509
        %v781 = vsel %vm780, %v720, %v779
        %vm782 = vcmask 1046534
        %v783 = vsel %vm782, %v734, %v781
        %vm784 = vcmask 1047559
        %v785 = vsel %vm784, %v748, %v783
        %v786 = vsel %vm772, %v671, %v657
        %v787 = vsel %vm774, %v685, %v786
        %v788 = vsel %vm776, %v699, %v787
        %v789 = vsel %vm778, %v713, %v788
        %v790 = vsel %vm780, %v727, %v789
        %v791 = vsel %vm782, %v741, %v790
        %v792 = vsel %vm784, %v755, %v791
        %795 = vst [vmem:[%s176] sm:$0xff] %v785
        %796 = vst [vmem:[%s176 + $0x8] sm:$0xff] %v792
        %s797 = sand.u32 %s92, 1
        %s798 = scalar_lea.sflag [#allocation3], %s797
        %s799 = sand.u32 %s92, 1
        %s800 = smul.addr %s799, 16
        %s801 = scalar_lea.vmem [#allocation2], %s800
        // Predicated region
        $region29: #{tpu_custom_call.1} parent=27 // pred_check
          %p802 = pneg %p102
        $region30: #{tpu_custom_call.1} parent=27 // pred_check_branch
          %804 = sbr.rel (%p802) target = $region32
        $region31: #{tpu_custom_call.1} parent=27 // pred_region
          %s805 = smul.u32 2, %s21
          %s807 = ssub.s32 256, 256
          %808 = vsyncadd %s798, %s807
          %s809 = smul.addr %s20, 2
          %s810 = sadd.s32 %s805, %s809
          %s811 = smul.addr %s810, 128
          %s812 = scalar_lea.hbm %s2, %s811
          %s814 = sshll.u32 %s801, 4
          %s815 = int_to_ptr.vmem [resolvable:$true] %s814
          %817 = dma.vmem_to_hbm [thread:$0]  %s815, 256, %s812, %s798
        $region32: #{tpu_custom_call.1} parent=27 // pred_fallthru
          _
      $region28: #{tpu_custom_call.1} parent=5 // pred_fallthru
        _
      %p818 = scmp.le.s32.totalorder 2, %s11
      // Predicated region
      $region33: #{tpu_custom_call.1} parent=5 // pred_check
        %p819 = pneg %p818
      $region34: #{tpu_custom_call.1} parent=5 // pred_check_branch
        %821 = sbr.rel (%p819) target = $region36
      $region35: #{tpu_custom_call.1} parent=5 // pred_region
        %s822 = ssub.s32 %s11, 2
        // Predicated region
        $region37: #{tpu_custom_call.1} parent=35 // pred_check
          %p823 = pneg %p108
        $region38: #{tpu_custom_call.1} parent=35 // pred_check_branch
          %825 = sbr.rel (%p823) target = $region40
        $region39: #{tpu_custom_call.1} parent=35 // pred_region
          %s826 = sand.u32 %s93, 1
          %s827 = scalar_lea.sflag [#allocation3], %s826
          %s828 = sand.u32 %s93, 1
          %s829 = smul.addr %s828, 16
          %s830 = scalar_lea.vmem [#allocation2], %s829
          %831 = dma.done %s827, 256
        $region40: #{tpu_custom_call.1} parent=35 // pred_fallthru
          _
      $region36: #{tpu_custom_call.1} parent=5 // pred_fallthru
        _
    $region6: #{tpu_custom_call.1} parent=1 // loop_footer
      %s15 = sadd.s32 1, %s11
    $region7: #{tpu_custom_call.1} parent=1 // loop_footer_branch
      %10 = sbr.rel target = $region3
    $region8: #{tpu_custom_call.1} parent=1 // loop_exit
      _
    %832 = vsyncpa [#allocation3], 1
    %s833 = scalar_lea.sflag [#allocation3], 1
    %834 = vsyncpa %s833, 1

</llo_original>
